<compile_context>
chip_gen: v5e
topology: v5e:2x2
jax: 0.10.0
libtpu: 0.0.40
codegen_flags: <defaults>
</compile_context>

<pallas_src>
import math

import jax
import jax.numpy as jnp
from jax import lax
from jax.experimental import pallas as pl
from jax.experimental.pallas import tpu as pltpu

IGNORE_INDEX = -100


def _make_ce_partial_kernel(n_rows, tb):
    """Build the per-tile partial-CE kernel with N and TB baked in as constants."""

    def kernel(logits_ref, target_ref, out_ref):
        # logits_ref: (TB, C)  VMEM tile, native dtype (f32/bf16); boundary rows garbage
        # target_ref: (TB, 1)  i32 VMEM tile; boundary rows garbage
        # out_ref   : (1, 8, 128) f32 partials: sublane 0 = sum of row losses,
        #                                        sublane 1 = count of valid rows
        x = logits_ref[...].astype(jnp.float32)                 # (TB, C)
        _, c = x.shape

        # Row-wise log-sum-exp along the lane (class) axis.
        m = jnp.max(x, axis=-1, keepdims=True)                                # (TB, 1)
        lse = m + jnp.log(jnp.sum(jnp.exp(x - m), axis=-1, keepdims=True))    # (TB, 1)

        # Gather logit at the target class via one-hot select (no dynamic gather on TPU).
        tgt = target_ref[...]                                                 # (TB, 1) i32
        class_ids = lax.broadcasted_iota(jnp.int32, (1, c), 1)                # (1, C)
        one_hot = class_ids == tgt                                            # (TB, C) via bcast
        picked = jnp.sum(jnp.where(one_hot, x, 0.0), axis=-1, keepdims=True)  # (TB, 1)

        # Valid rows: inside the real batch AND not ignore_index. NaN-safe select:
        # boundary-row logits are unspecified (can be inf/NaN), so never multiply.
        row_ids = pl.program_id(0) * tb + lax.broadcasted_iota(jnp.int32, (tb, 1), 0)
        valid = (row_ids < n_rows) & (tgt != IGNORE_INDEX)                    # (TB, 1) bool
        per_row = jnp.where(valid, lse - picked, 0.0)                         # (TB, 1)

        tile_sum = jnp.sum(per_row)                     # scalar f32
        tile_cnt = jnp.sum(valid.astype(jnp.float32))   # scalar f32

        # Lane-dense (1,8,128) partial block: sublane 0 = sum, sublane 1 = count.
        sub = lax.broadcasted_iota(jnp.int32, (1, 8, 128), 1)
        out_ref[...] = jnp.where(sub == 0, tile_sum, jnp.where(sub == 1, tile_cnt, 0.0))

    return kernel


def cross_entropy_mean_pallas(logits, targets, *, max_tb=2048):
    """Mean cross-entropy (log_softmax + NLL, reduction='mean', ignore_index=-100)."""
    n, c = logits.shape
    if not jnp.issubdtype(logits.dtype, jnp.floating):
        logits = logits.astype(jnp.float32)

    # Batch tile: multiple of 8, as large as reasonable. Guard VMEM for the case
    # this kernel is reused with large class counts (matters on v7x's 64 MiB VMEM):
    # ~8x tb*cp*4 B covers the 2 input buffers plus f32 cast / exp / where temps.
    cp_lanes = ((c + 127) // 128) * 128           # physical lane width of a row
    vmem_budget = 8 * 1024 * 1024
    tb_cap = max(8, (vmem_budget // (cp_lanes * 4 * 8)) // 8 * 8)
    tb = min(((n + 7) // 8) * 8, max_tb, tb_cap)
    num_tiles = pl.cdiv(n, tb)

    # Targets as an (N, 1) i32 column (cheap: N x 4 B). Logits are fed unpadded,
    # in their native dtype; boundary blocks are masked in-kernel.
    t = targets.reshape(n, 1).astype(jnp.int32)

    partials = pl.pallas_call(
        _make_ce_partial_kernel(n, tb),
        out_shape=jax.ShapeDtypeStruct((num_tiles, 8, 128), jnp.float32),
        grid_spec=pltpu.PrefetchScalarGridSpec(
            num_scalar_prefetch=0,
            grid=(num_tiles,),
            in_specs=[
                # Last dim = full array dim C -> legal block shape, no class pad needed.
                pl.BlockSpec((tb, c), lambda i: (i, 0)),   # logits tile (native dtype)
                pl.BlockSpec((tb, 1), lambda i: (i, 0)),   # target tile
            ],
            out_specs=pl.BlockSpec((1, 8, 128), lambda i: (i, 0, 0)),
        ),
        compiler_params=pltpu.CompilerParams(
            # Each tile writes its own partial block -> batch axis fully parallel
            # (lets Mosaic shard the grid across both TensorCores on v7x).
            dimension_semantics=("parallel",),
        ),
    )(logits, t)

    total_sum = jnp.sum(partials[:, 0, 0])
    total_cnt = jnp.sum(partials[:, 1, 0])
    # 'mean' reduction: sum of losses / number of non-ignored targets
    # (NaN if all targets are ignore_index, matching PyTorch).
    return total_sum / total_cnt


def cross_entropy_loss_act(logits, targets, *, max_tb=2048):
    """CrossEntropyLoss_act.forward: err = 18/pi * atan(ce)**2 + ce."""
    ce = cross_entropy_mean_pallas(logits, targets, max_tb=max_tb)
    # Scalar post-transform of the already-reduced loss (glue on a single scalar).
    return (18.0 / math.pi) * jnp.arctan(ce) ** 2 + ce


def _reference(logits, targets):
    logits = logits.astype(jnp.float32)
    logp = jax.nn.log_softmax(logits, axis=1)
    picked = jnp.take_along_axis(
        logp, jnp.clip(targets, 0, logits.shape[1] - 1).reshape(-1, 1), axis=1)[:, 0]
    valid = targets != IGNORE_INDEX
    ce = -jnp.sum(jnp.where(valid, picked, 0.0)) / jnp.sum(valid.astype(jnp.float32))
    return (18.0 / math.pi) * jnp.arctan(ce) ** 2 + ce


if __name__ == "__main__":
    key = jax.random.PRNGKey(0)
    k1, k2, k3, k4, k5, k6 = jax.random.split(key, 6)

    # Small CIFAR-100-like shapes: 8 samples, 100 classes.
    N, C = 8, 100
    logits = jax.random.normal(k1, (N, C), dtype=jnp.float32)
    targets = jax.random.randint(k2, (N,), 0, C, dtype=jnp.int32)

    out = jax.block_until_ready(cross_entropy_loss_act(logits, targets))
    ref = _reference(logits, targets)
    assert jnp.allclose(out, ref, rtol=1e-5, atol=1e-5), (out, ref)

    # Multi-tile path (grid > 1, parallel partial sums) + an ignore_index row.
    N2 = 24
    logits2 = jax.random.normal(k3, (N2, C), dtype=jnp.float32)
    targets2 = jax.random.randint(k4, (N2,), 0, C, dtype=jnp.int32)
    targets2 = targets2.at[5].set(IGNORE_INDEX)
    out2 = jax.block_until_ready(cross_entropy_loss_act(logits2, targets2, max_tb=8))
    ref2 = _reference(logits2, targets2)
    assert jnp.allclose(out2, ref2, rtol=1e-5, atol=1e-5), (out2, ref2)

    # Ragged batch (N not a multiple of the tile) -> exercises the in-kernel row mask
    # on a boundary block whose padded rows hold unspecified data.
    N3 = 13
    logits3 = jax.random.normal(k5, (N3, C), dtype=jnp.float32)
    targets3 = jax.random.randint(k6, (N3,), 0, C, dtype=jnp.int32)
    out3 = jax.block_until_ready(cross_entropy_loss_act(logits3, targets3, max_tb=8))
    ref3 = _reference(logits3, targets3)
    assert jnp.allclose(out3, ref3, rtol=1e-5, atol=1e-5), (out3, ref3)

    # Native bf16 logits path (no wrapper-side cast/pad copies, f32 math in-kernel).
    logits4 = logits.astype(jnp.bfloat16)
    out4 = jax.block_until_ready(cross_entropy_loss_act(logits4, targets))
    ref4 = _reference(logits4.astype(jnp.float32), targets)
    assert jnp.allclose(out4, ref4, rtol=5e-3, atol=5e-3), (out4, ref4)

    print("KERNEL_OK")
</pallas_src>

<mosaic_0001>
module attributes {stable_mosaic.version = 11 : i64} {
  func.func @kernel(%arg0: i32, %arg1: memref<8x100xf32, #tpu.memory_space<vmem>>, %arg2: memref<8x1xi32, #tpu.memory_space<vmem>>, %arg3: memref<1x8x128xf32, #tpu.memory_space<vmem>>) attributes {dimension_semantics = [#tpu.dimension_semantics<parallel>], iteration_bounds = array<i64: 1>, scalar_prefetch = 0 : i64, scratch_operands = 0 : i64, tpu.core_type = #tpu.core_type<tc>, window_params = [{transform_indices = @transform_0, window_bounds = array<i64: 8, 100>}, {transform_indices = @transform_1, window_bounds = array<i64: 8, 1>}, {transform_indices = @transform_2, window_bounds = array<i64: 1, 8, 128>}]} {
    %c0 = arith.constant 0 : index
    %c0_0 = arith.constant 0 : index
    %0 = vector.load %arg1[%c0, %c0_0] : memref<8x100xf32, #tpu.memory_space<vmem>>, vector<8x100xf32>
    %cst = arith.constant dense<0xFF800000> : vector<8xf32>
    %1 = vector.multi_reduction <maximumf>, %0, %cst [1] : vector<8x100xf32> to vector<8xf32>
    %2 = vector.shape_cast %1 : vector<8xf32> to vector<8x1xf32>
    %3 = vector.broadcast %2 : vector<8x1xf32> to vector<8x100xf32>
    %4 = arith.subf %0, %3 : vector<8x100xf32>
    %5 = math.exp %4 : vector<8x100xf32>
    %cst_1 = arith.constant dense<0.000000e+00> : vector<8xf32>
    %6 = vector.multi_reduction <add>, %5, %cst_1 [1] : vector<8x100xf32> to vector<8xf32>
    %7 = vector.shape_cast %6 : vector<8xf32> to vector<8x1xf32>
    %8 = math.log %7 : vector<8x1xf32>
    %9 = arith.addf %2, %8 : vector<8x1xf32>
    %c0_2 = arith.constant 0 : index
    %c0_3 = arith.constant 0 : index
    %10 = vector.load %arg2[%c0_2, %c0_3] : memref<8x1xi32, #tpu.memory_space<vmem>>, vector<8x1xi32>
    %11 = tpu.iota {dimensions = array<i32: 1>} : vector<1x100xi32>
    %12 = vector.broadcast %11 : vector<1x100xi32> to vector<8x100xi32>
    %13 = vector.broadcast %10 : vector<8x1xi32> to vector<8x100xi32>
    %14 = arith.cmpi eq, %12, %13 : vector<8x100xi32>
    %cst_4 = arith.constant 0.000000e+00 : f32
    %15 = vector.broadcast %cst_4 : f32 to vector<8x100xf32>
    %16 = arith.select %14, %0, %15 : vector<8x100xi1>, vector<8x100xf32>
    %cst_5 = arith.constant dense<0.000000e+00> : vector<8xf32>
    %17 = vector.multi_reduction <add>, %16, %cst_5 [1] : vector<8x100xf32> to vector<8xf32>
    %18 = vector.shape_cast %17 : vector<8xf32> to vector<8x1xf32>
    %c8_i32 = arith.constant 8 : i32
    %19 = arith.muli %arg0, %c8_i32 : i32
    %20 = tpu.iota {dimensions = array<i32: 0>} : vector<8x1xi32>
    %21 = vector.broadcast %19 : i32 to vector<8x1xi32>
    %22 = arith.addi %21, %20 : vector<8x1xi32>
    %c8_i32_6 = arith.constant 8 : i32
    %23 = vector.broadcast %c8_i32_6 : i32 to vector<8x1xi32>
    %24 = arith.cmpi slt, %22, %23 : vector<8x1xi32>
    %c-100_i32 = arith.constant -100 : i32
    %25 = vector.broadcast %c-100_i32 : i32 to vector<8x1xi32>
    %26 = arith.cmpi ne, %10, %25 : vector<8x1xi32>
    %27 = arith.andi %24, %26 : vector<8x1xi1>
    %28 = arith.subf %9, %18 : vector<8x1xf32>
    %cst_7 = arith.constant 0.000000e+00 : f32
    %29 = vector.broadcast %cst_7 : f32 to vector<8x1xf32>
    %30 = arith.select %27, %28, %29 : vector<8x1xi1>, vector<8x1xf32>
    %31 = vector.shape_cast %30 : vector<8x1xf32> to vector<1x8x1xf32>
    %cst_8 = arith.constant dense<0.000000e+00> : vector<1xf32>
    %32 = vector.multi_reduction <add>, %31, %cst_8 [1, 2] : vector<1x8x1xf32> to vector<1xf32>
    %33 = vector.shape_cast %32 : vector<1xf32> to vector<1x1x1xf32>
    %34 = vector.extract %33[0, 0, 0] : f32 from vector<1x1x1xf32>
    %35 = arith.extui %27 : vector<8x1xi1> to vector<8x1xi32>
    %36 = arith.sitofp %35 : vector<8x1xi32> to vector<8x1xf32>
    %37 = vector.shape_cast %36 : vector<8x1xf32> to vector<1x8x1xf32>
    %cst_9 = arith.constant dense<0.000000e+00> : vector<1xf32>
    %38 = vector.multi_reduction <add>, %37, %cst_9 [1, 2] : vector<1x8x1xf32> to vector<1xf32>
    %39 = vector.shape_cast %38 : vector<1xf32> to vector<1x1x1xf32>
    %40 = vector.extract %39[0, 0, 0] : f32 from vector<1x1x1xf32>
    %41 = tpu.iota {dimensions = array<i32: 1>} : vector<1x8x128xi32>
    %c0_i32 = arith.constant 0 : i32
    %42 = vector.broadcast %c0_i32 : i32 to vector<1x8x128xi32>
    %43 = arith.cmpi eq, %41, %42 : vector<1x8x128xi32>
    %c1_i32 = arith.constant 1 : i32
    %44 = vector.broadcast %c1_i32 : i32 to vector<1x8x128xi32>
    %45 = arith.cmpi eq, %41, %44 : vector<1x8x128xi32>
    %cst_10 = arith.constant 0.000000e+00 : f32
    %46 = vector.broadcast %40 : f32 to vector<1x8x128xf32>
    %47 = vector.broadcast %cst_10 : f32 to vector<1x8x128xf32>
    %48 = arith.select %45, %46, %47 : vector<1x8x128xi1>, vector<1x8x128xf32>
    %49 = vector.broadcast %34 : f32 to vector<1x8x128xf32>
    %50 = arith.select %43, %49, %48 : vector<1x8x128xi1>, vector<1x8x128xf32>
    %c0_11 = arith.constant 0 : index
    %c0_12 = arith.constant 0 : index
    %c0_13 = arith.constant 0 : index
    %51 = vector.load %arg3[%c0_11, %c0_12, %c0_13] : memref<1x8x128xf32, #tpu.memory_space<vmem>>, vector<1x8x128xf32>
    tpu.vector_store %arg3[%c0_11, %c0_12, %c0_13], %50 {strides = array<i32>} : memref<1x8x128xf32, #tpu.memory_space<vmem>>, vector<1x8x128xf32>,
    return
  }
  func.func @transform_0(%arg0: i32) -> (i32, i32) {
    %c0_i32 = arith.constant 0 : i32
    %c0_i32_0 = arith.constant 0 : i32
    return %arg0, %c0_i32 : i32, i32
  }
  func.func @transform_1(%arg0: i32) -> (i32, i32) {
    %c0_i32 = arith.constant 0 : i32
    %c0_i32_0 = arith.constant 0 : i32
    return %arg0, %c0_i32 : i32, i32
  }
  func.func @transform_2(%arg0: i32) -> (i32, i32, i32) {
    %c0_i32 = arith.constant 0 : i32
    %c0_i32_0 = arith.constant 0 : i32
    %c0_i32_1 = arith.constant 0 : i32
    return %arg0, %c0_i32, %c0_i32_0 : i32, i32, i32
  }
}

</mosaic_0001>

<llo_original>
// kernel: tpu_custom_call.1
$region0: #{tpu_custom_call.1}
  #allocation0 [shape = 'u32[]', space=smem, size = 0x4, offset = 0x4, fixed_abs, tag = 'smem constant byte address 0x4 - core index']
  #allocation1 [shape = 'u32[72,128]{1,0:T(1,128)}', space=vmem, size = 0x9000, scoped, tag = 'internal scratch']
  %s0 = inlined_call_operand.vmem [shape: f32[8,100], index: 0, kind: input, shape index: {}]
  %s1 = inlined_call_operand.vmem [shape: s32[8,1], index: 1, kind: input, shape index: {}]
  %s2 = inlined_call_operand.hbm [shape: f32[1,8,128], index: 2, kind: output, shape index: {}]
  %s3 = sld [smem:[#allocation0]]
  $region18: #{tpu_custom_call.1} parent=0
    _
  %s5 = ssub.s32 1, %s3
  %s6 = scalar_select 0, %s5, %s3
  $region1: #{tpu_custom_call.1} parent=0
    #allocation2 [shape = 'u8[4096]{0}', space=vmem, size = 0x1000, scoped, tag = 'output window, operand 0, single buffered']
    #allocation3 [shape = 's32[1]{0}', space=sflag, size = 0x4, scoped, tag = 'scoped memory for tpu_custom_call.1']
    %7 = vsyncpa [#allocation3], 0
    // Predicated region
    $region2: #{tpu_custom_call.1} parent=1 // pred_check
      _
    $region3: #{tpu_custom_call.1} parent=1 // pred_check_branch
      %9 = sbr.rel (0) target = $region5
    $region4: #{tpu_custom_call.1} parent=1 // pred_region
      _
    $region5: #{tpu_custom_call.1} parent=1 // pred_fallthru
      _
    // Predicated region
    $region6: #{tpu_custom_call.1} parent=1 // pred_check
      _
    $region7: #{tpu_custom_call.1} parent=1 // pred_check_branch
      %11 = sbr.rel (0) target = $region9
    $region8: #{tpu_custom_call.1} parent=1 // pred_region
      _
    $region9: #{tpu_custom_call.1} parent=1 // pred_fallthru
      _
    %v12 = vld [vmem:[%s0] sm:$0xff]
    %vm13 = vcmask 818176
    %v14 = vsel %vm13, %v12, -inf
    %15 = vmax.xlane.f32.xlu0 %v14
    %v16 = vpop.xlane.xlu0 %15
    %v17 = vsub.f32 %v12, %v16
    %v18 = vmul.f32 %v17, 1.442695
    %v19 = vpow.pop %v18
    %v20 = vsel %vm13, %v19, 0.0
    %21 = vadd.xlane.f32.xlu0 %v20
    %v22 = vpop.xlane.xlu0 %21
    %v23 = vlog2.pop %v22
    %v24 = vmul.f32 %v23, 0.6931472
    %v25 = vadd.f32 %v16, %v24
    %v26 = vld [vmem:[%s1] sm:$0xff]
    %v27 = vlaneseq
    %v28 = vand.u32 %v27, 127
    %29 = vset.pattern.permute.xlu0 0
    %30 = vperm.xlu0 %29, %v26
    %v31 = vpop.permute.xlu0 %30
    %vm32 = vcmp.eq.s32.totalorder %v28, %v31
    %v33 = vsel %vm32, %v12, 0.0
    %v34 = vsel %vm13, %v33, 0.0
    %35 = vadd.xlane.f32.xlu0 %v34
    %v36 = vpop.xlane.xlu0 %35
    %s37 = smul.u32 0, 8
    %v38 = vlaneseq
    %v39 = vshrl.u32 %v38, 7
    %v40 = vstv %s37
    %v41 = vadd.s32 %v40, %v39
    %vm42 = vcmp.lt.s32.totalorder %v41, 8
    %vm43 = vcmp.ne.s32.totalorder %v26, 4294967196
    %vm44 = vmand %vm42, %vm43
    %v45 = vsub.f32 %v25, %v36
    %v46 = vsel %vm44, %v45, 0.0
    %vm47 = vcmask 7168
    %v48 = vsel %vm47, %v46, 0.0
    %49 = vadd.xlane.f32.xlu0 %v48
    %v50 = vpop.xlane.xlu0 %49
    %v51 = vrot.slane %v50, 4
    %v52 = vadd.f32 %v50, %v51
    %v53 = vrot.slane %v52, 2
    %v54 = vadd.f32 %v52, %v53
    %v55 = vrot.slane %v54, 1
    %v56 = vadd.f32 %v54, %v55
    %s57 = vtos %v56
    %v58 = vsel %vm44, 1, 0
    %v59 = vcvt.s32.f32 %v58
    %v60 = vsel %vm47, %v59, 0.0
    %61 = vadd.xlane.f32.xlu0 %v60
    %v62 = vpop.xlane.xlu0 %61
    %v63 = vrot.slane %v62, 4
    %v64 = vadd.f32 %v62, %v63
    %v65 = vrot.slane %v64, 2
    %v66 = vadd.f32 %v64, %v65
    %v67 = vrot.slane %v66, 1
    %v68 = vadd.f32 %v66, %v67
    %s69 = vtos %v68
    %vm70 = vcmp.eq.s32.totalorder %v39, 0
    %vm71 = vcmp.eq.s32.totalorder %v39, 1
    %v72 = vstv %s69
    %v73 = vsel %vm71, %v72, 0.0
    %v74 = vstv %s57
    %v75 = vsel %vm70, %v74, %v73
    %76 = vst [vmem:[#allocation2] sm:$0xff] %v75
    // Predicated region
    $region10: #{tpu_custom_call.1} parent=1 // pred_check
      _
    $region11: #{tpu_custom_call.1} parent=1 // pred_check_branch
      %78 = sbr.rel (0) target = $region13
    $region12: #{tpu_custom_call.1} parent=1 // pred_region
      %80 = vsyncadd [#allocation3], 0
      %s82 = sshll.u32 [#allocation2], 4
      %s83 = int_to_ptr.vmem [resolvable:$true] %s82
      %s84 = sshll.u32 %s2, 4
      %s85 = int_to_ptr.hbm [resolvable:$true] %s84
      %87 = dma.vmem_to_hbm [thread:$0]  %s83, 128, %s85, [#allocation3]
    $region13: #{tpu_custom_call.1} parent=1 // pred_fallthru
      _
    // Predicated region
    $region14: #{tpu_custom_call.1} parent=1 // pred_check
      _
    $region15: #{tpu_custom_call.1} parent=1 // pred_check_branch
      %89 = sbr.rel (0) target = $region17
    $region16: #{tpu_custom_call.1} parent=1 // pred_region
      %91 = dma.done [#allocation3], 128
    $region17: #{tpu_custom_call.1} parent=1 // pred_fallthru
      _
    %92 = vsyncpa [#allocation3], 1

</llo_original>
